<compile_context>
chip_gen: v6e
topology: v6e:2x2x1
jax: 0.10.0
libtpu: 0.0.40
codegen_flags: <defaults>
</compile_context>

<pallas_src>
import jax
import jax.numpy as jnp
from jax.experimental import pallas as pl
from jax.experimental.pallas import tpu as pltpu

NEG_INF = -1e30
LANE = 128


def _round_up(a: int, b: int) -> int:
    return ((a + b - 1) // b) * b


def net_kernel(x_ref, w1_ref, b1_ref, w2_ref, b2_ref, o_ref):
    # hidden = relu(x @ W1 + b1); MXU matmul with f32 accumulation.
    h = jnp.dot(x_ref[...], w1_ref[...], preferred_element_type=jnp.float32)
    h = jnp.maximum(h + b1_ref[...], 0.0)

    # logits = h @ W2 + b2.  b2's padded class lanes already hold -1e30
    # (baked in the wrapper), so no in-kernel mask is needed.
    logits = jnp.dot(h.astype(w2_ref.dtype), w2_ref[...],
                     preferred_element_type=jnp.float32) + b2_ref[...]

    # Numerically stable softmax in f32; exact normalization (rows sum to 1).
    m = jnp.max(logits, axis=-1, keepdims=True)
    e = jnp.exp(logits - m)
    denom = jnp.sum(e, axis=-1, keepdims=True)
    o_ref[...] = (e / denom).astype(o_ref.dtype)


def prepare_params(w1, b1, w2, b2, *, compute_dtype=jnp.float32):
    """Pad + cast the model parameters once (outside the per-call hot path)."""
    F, H = w1.shape
    O = w2.shape[1]
    Fp, Hp, Op = _round_up(F, LANE), _round_up(H, LANE), _round_up(O, LANE)

    w1p = jnp.zeros((Fp, Hp), compute_dtype).at[:F, :H].set(w1.astype(compute_dtype))
    w2p = jnp.zeros((Hp, Op), compute_dtype).at[:H, :O].set(w2.astype(compute_dtype))
    # Biases stay f32 (added to the f32 accumulator).  Padded class lanes of
    # b2 carry -1e30 so they vanish in the softmax without an in-kernel mask.
    b1p = jnp.zeros((1, Hp), jnp.float32).at[:, :H].set(b1.reshape(1, H))
    b2p = jnp.full((1, Op), NEG_INF, jnp.float32).at[:, :O].set(b2.reshape(1, O))

    return {"w1": w1p, "b1": b1p, "w2": w2p, "b2": b2p,
            "dims": (F, H, O), "compute_dtype": compute_dtype}


def net_forward(x, params, *, block_b: int = 256, out_dtype=jnp.float32):
    """softmax(relu(x @ w1 + b1) @ w2 + b2, axis=-1) via a Pallas TPU kernel.

    block_b: max batch tile.  At demo scale this collapses to one grid step;
             pick ~Bp/2 on v7x to shard the batch across both TensorCores,
             128 on v5e, 256 on v6e/v7x for large B.
    """
    B, F = x.shape
    Fk, Hk, O = params["dims"]
    assert F == Fk, "feature dim mismatch"
    cd = params["compute_dtype"]
    w1p, b1p, w2p, b2p = params["w1"], params["b1"], params["w2"], params["b2"]
    Fp, Hp = w1p.shape
    Op = w2p.shape[1]

    # Batch tile: multiple of the sublane pack (16 for bf16, 8 for f32),
    # capped by block_b; single grid step whenever the batch fits.
    sub_pack = 16 if jnp.dtype(cd) == jnp.dtype(jnp.bfloat16) else 8
    TB = min(block_b, _round_up(B, sub_pack))
    TB = _round_up(TB, sub_pack)
    Bp = _round_up(B, TB)

    # Only x is padded per call, built directly in compute_dtype.
    xp = jnp.zeros((Bp, Fp), cd).at[:B, :F].set(x.astype(cd))

    grid = (Bp // TB,)

    # VMEM budget: resident weights/biases + double-buffered x/out tiles.
    wsz = jnp.dtype(cd).itemsize
    osz = jnp.dtype(out_dtype).itemsize
    need = (w1p.size * wsz + w2p.size * wsz + (b1p.size + b2p.size) * 4
            + 2 * TB * Fp * wsz + 2 * TB * Op * osz)
    vmem_limit = int(min(64 * 1024 * 1024, max(4 * 1024 * 1024, 2 * need)))

    out = pl.pallas_call(
        net_kernel,
        out_shape=jax.ShapeDtypeStruct((Bp, Op), out_dtype),
        grid=grid,
        in_specs=[
            pl.BlockSpec((TB, Fp), lambda i: (i, 0)),   # x: tiled over batch
            pl.BlockSpec((Fp, Hp), lambda i: (0, 0)),   # W1: resident
            pl.BlockSpec((1, Hp), lambda i: (0, 0)),    # b1: resident
            pl.BlockSpec((Hp, Op), lambda i: (0, 0)),   # W2: resident
            pl.BlockSpec((1, Op), lambda i: (0, 0)),    # b2: resident (mask baked in)
        ],
        out_specs=pl.BlockSpec((TB, Op), lambda i: (i, 0)),
        compiler_params=pltpu.CompilerParams(
            dimension_semantics=("parallel",),
            vmem_limit_bytes=vmem_limit),
    )(xp, w1p, b1p, w2p, b2p)

    # Slice away batch / class padding.
    return out[:B, :O]


def _reference(x, w1, b1, w2, b2, compute_dtype=jnp.float32):
    # Mirror the kernel's casting so bf16 mode is compared apples-to-apples.
    xc = x.astype(compute_dtype).astype(jnp.float32)
    w1c = w1.astype(compute_dtype).astype(jnp.float32)
    w2c = w2.astype(compute_dtype).astype(jnp.float32)
    h = jnp.maximum(xc @ w1c + b1, 0.0)
    logits = h.astype(compute_dtype).astype(jnp.float32) @ w2c + b2
    return jax.nn.softmax(logits, axis=-1)


if __name__ == "__main__":
    # Shapes implied by the script: n_feature=2, n_output=2, dataset of 200
    # 2-D points (two Gaussian clusters at +2 / -2).  Modest hidden width.
    B, n_feature, n_hidden, n_output = 200, 2, 32, 2

    key = jax.random.PRNGKey(0)
    kx, ks, k1, kb1, k2, kb2 = jax.random.split(key, 6)

    signs = jnp.where(jax.random.bernoulli(ks, 0.5, (B, 1)), 2.0, -2.0)
    x = jax.random.normal(kx, (B, n_feature), dtype=jnp.float32) + signs

    # Deterministic parameter init (uniform, like torch Linear default scale).
    lim1 = 1.0 / (n_feature ** 0.5)
    w1 = jax.random.uniform(k1, (n_feature, n_hidden), jnp.float32, -lim1, lim1)
    b1 = jax.random.uniform(kb1, (1, n_hidden), jnp.float32, -lim1, lim1)
    lim2 = 1.0 / (n_hidden ** 0.5)
    w2 = jax.random.uniform(k2, (n_hidden, n_output), jnp.float32, -lim2, lim2)
    b2 = jax.random.uniform(kb2, (1, n_output), jnp.float32, -lim2, lim2)

    # --- f32 MXU path, single grid step (the demo-scale optimum) -------------
    params_f32 = prepare_params(w1, b1, w2, b2, compute_dtype=jnp.float32)
    out_f32 = jax.block_until_ready(net_forward(x, params_f32, block_b=256))
    ref_f32 = _reference(x, w1, b1, w2, b2, jnp.float32)
    assert out_f32.shape == (B, n_output)
    assert jnp.allclose(jnp.sum(out_f32, axis=-1), 1.0, atol=1e-3)
    assert jnp.allclose(out_f32, ref_f32, atol=1e-3, rtol=1e-3)

    # --- f32, multi-step grid (exercises the batch-tiled / padded-row path) --
    out_tiled = jax.block_until_ready(net_forward(x, params_f32, block_b=64))
    assert jnp.allclose(out_tiled, ref_f32, atol=1e-3, rtol=1e-3)

    # --- bf16 MXU inputs, f32 accumulation (v5e-critical, v6e/v7x faster) ----
    params_bf16 = prepare_params(w1, b1, w2, b2, compute_dtype=jnp.bfloat16)
    out_bf16 = jax.block_until_ready(net_forward(x, params_bf16, block_b=256))
    ref_bf16 = _reference(x, w1, b1, w2, b2, jnp.bfloat16)
    assert jnp.allclose(jnp.sum(out_bf16, axis=-1), 1.0, atol=1e-3)
    assert jnp.allclose(out_bf16, ref_bf16, atol=2e-2, rtol=2e-2)

    print("KERNEL_OK")
</pallas_src>

<mosaic_0001>
module attributes {stable_mosaic.version = 11 : i64} {
  func.func @net_kernel(%arg0: i32, %arg1: memref<200x128xf32, #tpu.memory_space<vmem>>, %arg2: memref<128x128xf32, #tpu.memory_space<vmem>>, %arg3: memref<1x128xf32, #tpu.memory_space<vmem>>, %arg4: memref<128x128xf32, #tpu.memory_space<vmem>>, %arg5: memref<1x128xf32, #tpu.memory_space<vmem>>, %arg6: memref<200x128xf32, #tpu.memory_space<vmem>>) attributes {dimension_semantics = [#tpu.dimension_semantics<parallel>], iteration_bounds = array<i64: 1>, scalar_prefetch = 0 : i64, scratch_operands = 0 : i64, tpu.core_type = #tpu.core_type<tc>, window_params = [{transform_indices = @transform_0, window_bounds = array<i64: 200, 128>}, {pipeline_mode = #tpu.pipeline_mode<synchronous>, transform_indices = @transform_1, window_bounds = array<i64: 128, 128>}, {pipeline_mode = #tpu.pipeline_mode<synchronous>, transform_indices = @transform_2, window_bounds = array<i64: 1, 128>}, {pipeline_mode = #tpu.pipeline_mode<synchronous>, transform_indices = @transform_3, window_bounds = array<i64: 128, 128>}, {pipeline_mode = #tpu.pipeline_mode<synchronous>, transform_indices = @transform_4, window_bounds = array<i64: 1, 128>}, {transform_indices = @transform_5, window_bounds = array<i64: 200, 128>}]} {
    %c0 = arith.constant 0 : index
    %c0_0 = arith.constant 0 : index
    %0 = vector.load %arg1[%c0, %c0_0] : memref<200x128xf32, #tpu.memory_space<vmem>>, vector<200x128xf32>
    %c0_1 = arith.constant 0 : index
    %c0_2 = arith.constant 0 : index
    %1 = vector.load %arg2[%c0_1, %c0_2] : memref<128x128xf32, #tpu.memory_space<vmem>>, vector<128x128xf32>
    %cst = arith.constant dense<0.000000e+00> : vector<200x128xf32>
    %2 = tpu.matmul %0, %1, %cst {dimension_numbers = #tpu.dot_dimension_numbers<[1], [0], [0], [1], [0, 0, 1, 1], [], []>} : vector<200x128xf32>, vector<128x128xf32>, vector<200x128xf32> -> vector<200x128xf32>
    %c0_3 = arith.constant 0 : index
    %c0_4 = arith.constant 0 : index
    %3 = vector.load %arg3[%c0_3, %c0_4] : memref<1x128xf32, #tpu.memory_space<vmem>>, vector<1x128xf32>
    %4 = vector.broadcast %3 : vector<1x128xf32> to vector<200x128xf32>
    %5 = arith.addf %2, %4 : vector<200x128xf32>
    %cst_5 = arith.constant 0.000000e+00 : f32
    %6 = vector.broadcast %cst_5 : f32 to vector<200x128xf32>
    %7 = arith.maximumf %5, %6 : vector<200x128xf32>
    %c0_6 = arith.constant 0 : index
    %c0_7 = arith.constant 0 : index
    %8 = vector.load %arg4[%c0_6, %c0_7] : memref<128x128xf32, #tpu.memory_space<vmem>>, vector<128x128xf32>
    %cst_8 = arith.constant dense<0.000000e+00> : vector<200x128xf32>
    %9 = tpu.matmul %7, %8, %cst_8 {dimension_numbers = #tpu.dot_dimension_numbers<[1], [0], [0], [1], [0, 0, 1, 1], [], []>} : vector<200x128xf32>, vector<128x128xf32>, vector<200x128xf32> -> vector<200x128xf32>
    %c0_9 = arith.constant 0 : index
    %c0_10 = arith.constant 0 : index
    %10 = vector.load %arg5[%c0_9, %c0_10] : memref<1x128xf32, #tpu.memory_space<vmem>>, vector<1x128xf32>
    %11 = vector.broadcast %10 : vector<1x128xf32> to vector<200x128xf32>
    %12 = arith.addf %9, %11 : vector<200x128xf32>
    %cst_11 = arith.constant dense<0xFF800000> : vector<200xf32>
    %13 = vector.multi_reduction <maximumf>, %12, %cst_11 [1] : vector<200x128xf32> to vector<200xf32>
    %14 = vector.shape_cast %13 : vector<200xf32> to vector<200x1xf32>
    %15 = vector.broadcast %14 : vector<200x1xf32> to vector<200x128xf32>
    %16 = arith.subf %12, %15 : vector<200x128xf32>
    %17 = math.exp %16 : vector<200x128xf32>
    %cst_12 = arith.constant dense<0.000000e+00> : vector<200xf32>
    %18 = vector.multi_reduction <add>, %17, %cst_12 [1] : vector<200x128xf32> to vector<200xf32>
    %19 = vector.shape_cast %18 : vector<200xf32> to vector<200x1xf32>
    %20 = vector.broadcast %19 : vector<200x1xf32> to vector<200x128xf32>
    %21 = arith.divf %17, %20 : vector<200x128xf32>
    %c0_13 = arith.constant 0 : index
    %c0_14 = arith.constant 0 : index
    %22 = vector.load %arg6[%c0_13, %c0_14] : memref<200x128xf32, #tpu.memory_space<vmem>>, vector<200x128xf32>
    tpu.vector_store %arg6[%c0_13, %c0_14], %21 {strides = array<i32>} : memref<200x128xf32, #tpu.memory_space<vmem>>, vector<200x128xf32>,
    return
  }
  func.func @transform_0(%arg0: i32) -> (i32, i32) {
    %c0_i32 = arith.constant 0 : i32
    %c0_i32_0 = arith.constant 0 : i32
    return %arg0, %c0_i32 : i32, i32
  }
  func.func @transform_1(%arg0: i32) -> (i32, i32) {
    %c0_i32 = arith.constant 0 : i32
    %c0_i32_0 = arith.constant 0 : i32
    %c0_i32_1 = arith.constant 0 : i32
    return %c0_i32, %c0_i32_0 : i32, i32
  }
  func.func @transform_2(%arg0: i32) -> (i32, i32) {
    %c0_i32 = arith.constant 0 : i32
    %c0_i32_0 = arith.constant 0 : i32
    %c0_i32_1 = arith.constant 0 : i32
    return %c0_i32, %c0_i32_0 : i32, i32
  }
  func.func @transform_3(%arg0: i32) -> (i32, i32) {
    %c0_i32 = arith.constant 0 : i32
    %c0_i32_0 = arith.constant 0 : i32
    %c0_i32_1 = arith.constant 0 : i32
    return %c0_i32, %c0_i32_0 : i32, i32
  }
  func.func @transform_4(%arg0: i32) -> (i32, i32) {
    %c0_i32 = arith.constant 0 : i32
    %c0_i32_0 = arith.constant 0 : i32
    %c0_i32_1 = arith.constant 0 : i32
    return %c0_i32, %c0_i32_0 : i32, i32
  }
  func.func @transform_5(%arg0: i32) -> (i32, i32) {
    %c0_i32 = arith.constant 0 : i32
    %c0_i32_0 = arith.constant 0 : i32
    return %arg0, %c0_i32 : i32, i32
  }
}

</mosaic_0001>

<llo_original>
// kernel: tpu_custom_call.1
$region0: #{tpu_custom_call.1}
  #allocation0 [shape = 'u32[]', space=smem, size = 0x4, offset = 0x4, fixed_abs, tag = 'smem constant byte address 0x4 - core index']
  #allocation1 [shape = 'u32[144,128]{1,0:T(1,128)}', space=vmem, size = 0x12000, scoped, tag = 'internal scratch']
  %s0 = inlined_call_operand.hbm [shape: f32[200,128], index: 0, kind: input, shape index: {}]
  %s1 = inlined_call_operand.hbm [shape: f32[128,128], index: 1, kind: input, shape index: {}]
  %s2 = inlined_call_operand.vmem [shape: f32[1,128], index: 2, kind: input, shape index: {}]
  %s3 = inlined_call_operand.hbm [shape: f32[128,128], index: 3, kind: input, shape index: {}]
  %s4 = inlined_call_operand.vmem [shape: f32[1,128], index: 4, kind: input, shape index: {}]
  %s5 = inlined_call_operand.hbm [shape: f32[200,128], index: 5, kind: output, shape index: {}]
  %s6 = sld [smem:[#allocation0]]
  $region42: #{tpu_custom_call.1} parent=0
    _
  %s8 = ssub.s32 1, %s6
  %s9 = scalar_select 0, %s8, %s6
  $region1: #{tpu_custom_call.1} parent=0
    #allocation2 [shape = 'u8[102400]{0}', space=vmem, size = 0x19000, scoped, tag = 'input window, operand 0, single buffered']
    #allocation3 [shape = 's32[1]{0}', space=sflag, size = 0x4, scoped, tag = 'scoped memory for tpu_custom_call.1']
    #allocation4 [shape = 's32[1]{0}', space=sflag, size = 0x4, scoped, tag = 'scoped memory for tpu_custom_call.1']
    #allocation5 [shape = 'u8[65536]{0}', space=vmem, size = 0x10000, scoped, tag = 'input window, operand 1, single buffered']
    #allocation6 [shape = 's32[1]{0}', space=sflag, size = 0x4, scoped, tag = 'scoped memory for tpu_custom_call.1']
    #allocation7 [shape = 'u8[65536]{0}', space=vmem, size = 0x10000, scoped, tag = 'input window, operand 3, single buffered']
    #allocation8 [shape = 'u8[102400]{0}', space=vmem, size = 0x19000, scoped, tag = 'output window, operand 0, single buffered']
    %10 = vsyncpa [#allocation3], 0
    %11 = vsyncpa [#allocation6], 0
    %12 = vsyncpa [#allocation4], 0
    // Predicated region
    $region2: #{tpu_custom_call.1} parent=1 // pred_check
      _
    $region3: #{tpu_custom_call.1} parent=1 // pred_check_branch
      %14 = sbr.rel (0) target = $region5
    $region4: #{tpu_custom_call.1} parent=1 // pred_region
      %s16 = ssub.s32 3200, 3200
      %17 = vsyncadd [#allocation3], %s16
      %s18 = sshll.u32 [#allocation2], 4
      %s19 = int_to_ptr.vmem [resolvable:$true] %s18
      %24 = dma.hbm_to_vmem [thread:$0]  %s0, 3200, %s19, [#allocation3], 128, 128, 8
    $region5: #{tpu_custom_call.1} parent=1 // pred_fallthru
      _
    // Predicated region
    $region6: #{tpu_custom_call.1} parent=1 // pred_check
      _
    $region7: #{tpu_custom_call.1} parent=1 // pred_check_branch
      %26 = sbr.rel (0) target = $region9
    $region8: #{tpu_custom_call.1} parent=1 // pred_region
      %s28 = ssub.s32 2048, 2048
      %29 = vsyncadd [#allocation6], %s28
      %s30 = sshll.u32 [#allocation5], 4
      %s31 = int_to_ptr.vmem [resolvable:$true] %s30
      %36 = dma.hbm_to_vmem [thread:$0]  %s1, 2048, %s31, [#allocation6], 128, 128, 8
    $region9: #{tpu_custom_call.1} parent=1 // pred_fallthru
      _
    // Predicated region
    $region10: #{tpu_custom_call.1} parent=1 // pred_check
      _
    $region11: #{tpu_custom_call.1} parent=1 // pred_check_branch
      %38 = sbr.rel (0) target = $region13
    $region12: #{tpu_custom_call.1} parent=1 // pred_region
      _
    $region13: #{tpu_custom_call.1} parent=1 // pred_fallthru
      _
    // Predicated region
    $region14: #{tpu_custom_call.1} parent=1 // pred_check
      _
    $region15: #{tpu_custom_call.1} parent=1 // pred_check_branch
      %40 = sbr.rel (0) target = $region17
    $region16: #{tpu_custom_call.1} parent=1 // pred_region
      %s42 = ssub.s32 2048, 2048
      %43 = vsyncadd [#allocation6], %s42
      %s44 = sshll.u32 [#allocation7], 4
      %s45 = int_to_ptr.vmem [resolvable:$true] %s44
      %50 = dma.hbm_to_vmem [thread:$0]  %s3, 2048, %s45, [#allocation6], 128, 128, 8
    $region17: #{tpu_custom_call.1} parent=1 // pred_fallthru
      _
    // Predicated region
    $region18: #{tpu_custom_call.1} parent=1 // pred_check
      _
    $region19: #{tpu_custom_call.1} parent=1 // pred_check_branch
      %52 = sbr.rel (0) target = $region21
    $region20: #{tpu_custom_call.1} parent=1 // pred_region
      _
    $region21: #{tpu_custom_call.1} parent=1 // pred_fallthru
      _
    // Predicated region
    $region22: #{tpu_custom_call.1} parent=1 // pred_check
      _
    $region23: #{tpu_custom_call.1} parent=1 // pred_check_branch
      %54 = sbr.rel (0) target = $region25
    $region24: #{tpu_custom_call.1} parent=1 // pred_region
      %55 = dma.done [#allocation3], 3200
    $region25: #{tpu_custom_call.1} parent=1 // pred_fallthru
      _
    // Predicated region
    $region26: #{tpu_custom_call.1} parent=1 // pred_check
      _
    $region27: #{tpu_custom_call.1} parent=1 // pred_check_branch
      %57 = sbr.rel (0) target = $region29
    $region28: #{tpu_custom_call.1} parent=1 // pred_region
      %58 = dma.done [#allocation6], 2048
    $region29: #{tpu_custom_call.1} parent=1 // pred_fallthru
      _
    // Predicated region
    $region30: #{tpu_custom_call.1} parent=1 // pred_check
      _
    $region31: #{tpu_custom_call.1} parent=1 // pred_check_branch
      %60 = sbr.rel (0) target = $region33
    $region32: #{tpu_custom_call.1} parent=1 // pred_region
      %61 = dma.done [#allocation6], 2048
    $region33: #{tpu_custom_call.1} parent=1 // pred_fallthru
      _
    %v62 = vld [vmem:[#allocation2] sm:$0xff]
    %v63 = vld [vmem:[#allocation2 + $0x8] sm:$0xff]
    %v64 = vld [vmem:[#allocation2 + $0x10] sm:$0xff]
    %v65 = vld [vmem:[#allocation2 + $0x18] sm:$0xff]
    %v66 = vld [vmem:[#allocation2 + $0x20] sm:$0xff]
    %v67 = vld [vmem:[#allocation2 + $0x28] sm:$0xff]
    %v68 = vld [vmem:[#allocation2 + $0x30] sm:$0xff]
    %v69 = vld [vmem:[#allocation2 + $0x38] sm:$0xff]
    %v70 = vld [vmem:[#allocation2 + $0x40] sm:$0xff]
    %v71 = vld [vmem:[#allocation2 + $0x48] sm:$0xff]
    %v72 = vld [vmem:[#allocation2 + $0x50] sm:$0xff]
    %v73 = vld [vmem:[#allocation2 + $0x58] sm:$0xff]
    %v74 = vld [vmem:[#allocation2 + $0x60] sm:$0xff]
    %v75 = vld [vmem:[#allocation2 + $0x68] sm:$0xff]
    %v76 = vld [vmem:[#allocation2 + $0x70] sm:$0xff]
    %v77 = vld [vmem:[#allocation2 + $0x78] sm:$0xff]
    %v78 = vld [vmem:[#allocation2 + $0x80] sm:$0xff]
    %v79 = vld [vmem:[#allocation2 + $0x88] sm:$0xff]
    %v80 = vld [vmem:[#allocation2 + $0x90] sm:$0xff]
    %v81 = vld [vmem:[#allocation2 + $0x98] sm:$0xff]
    %v82 = vld [vmem:[#allocation2 + $0xa0] sm:$0xff]
    %v83 = vld [vmem:[#allocation2 + $0xa8] sm:$0xff]
    %v84 = vld [vmem:[#allocation2 + $0xb0] sm:$0xff]
    %v85 = vld [vmem:[#allocation2 + $0xb8] sm:$0xff]
    %v86 = vld [vmem:[#allocation2 + $0xc0] sm:$0xff]
    %v87 = vld [vmem:[#allocation5] sm:$0xff]
    %v88 = vld [vmem:[#allocation5 + $0x8] sm:$0xff]
    %v89 = vld [vmem:[#allocation5 + $0x10] sm:$0xff]
    %v90 = vld [vmem:[#allocation5 + $0x18] sm:$0xff]
    %v91 = vld [vmem:[#allocation5 + $0x20] sm:$0xff]
    %v92 = vld [vmem:[#allocation5 + $0x28] sm:$0xff]
    %v93 = vld [vmem:[#allocation5 + $0x30] sm:$0xff]
    %v94 = vld [vmem:[#allocation5 + $0x38] sm:$0xff]
    %v95 = vld [vmem:[#allocation5 + $0x40] sm:$0xff]
    %v96 = vld [vmem:[#allocation5 + $0x48] sm:$0xff]
    %v97 = vld [vmem:[#allocation5 + $0x50] sm:$0xff]
    %v98 = vld [vmem:[#allocation5 + $0x58] sm:$0xff]
    %v99 = vld [vmem:[#allocation5 + $0x60] sm:$0xff]
    %v100 = vld [vmem:[#allocation5 + $0x68] sm:$0xff]
    %v101 = vld [vmem:[#allocation5 + $0x70] sm:$0xff]
    %v102 = vld [vmem:[#allocation5 + $0x78] sm:$0xff]
    %v103 = vld [vmem:[%s2] sm:$0x1]
    %v105 = vlaneseq
    %v106 = vshrl.u32 %v105, 7
    %v107 = vsub.s32 0, %v106
    %v108 = vrot.slane %v103, %v107
    %110 = vmatprep.subr.mxu0 0.0
    %111 = vmatpush1.msra.mxu0 %v102
    %112 = vmatprep.subr.mxu0 0.0
    %113 = vmatpush1.msra.mxu0 %v101
    %114 = vmatprep.subr.mxu0 0.0
    %115 = vmatpush1.msra.mxu0 %v100
    %116 = vmatprep.subr.mxu0 0.0
    %117 = vmatpush1.msra.mxu0 %v99
    %118 = vmatprep.subr.mxu0 0.0
    %119 = vmatpush1.msra.mxu0 %v98
    %120 = vmatprep.subr.mxu0 0.0
    %121 = vmatpush1.msra.mxu0 %v97
    %122 = vmatprep.subr.mxu0 0.0
    %123 = vmatpush1.msra.mxu0 %v96
    %124 = vmatprep.subr.mxu0 0.0
    %125 = vmatpush1.msra.mxu0 %v95
    %126 = vmatprep.subr.mxu0 0.0
    %127 = vmatpush1.msra.mxu0 %v94
    %128 = vmatprep.subr.mxu0 0.0
    %129 = vmatpush1.msra.mxu0 %v93
    %130 = vmatprep.subr.mxu0 0.0
    %131 = vmatpush1.msra.mxu0 %v92
    %132 = vmatprep.subr.mxu0 0.0
    %133 = vmatpush1.msra.mxu0 %v91
    %134 = vmatprep.subr.mxu0 0.0
    %135 = vmatpush1.msra.mxu0 %v90
    %136 = vmatprep.subr.mxu0 0.0
    %137 = vmatpush1.msra.mxu0 %v89
    %138 = vmatprep.subr.mxu0 0.0
    %139 = vmatpush1.msra.mxu0 %v88
    %140 = vmatprep.subr.mxu0 0.0
    %141 = vmatpush1.msra.mxu0 %v87
    %142 = vmatprep.subr.mxu0 0.0
    %143 = vmatpush2.msra.mxu0 0.0
    %144 = vmatprep.subr.mxu0 0.0
    %145 = vmatpush2.msra.mxu0 0.0
    %146 = vmatprep.subr.mxu0 0.0
    %147 = vmatpush2.msra.mxu0 0.0
    %148 = vmatprep.subr.mxu0 0.0
    %149 = vmatpush2.msra.mxu0 0.0
    %150 = vmatprep.subr.mxu0 0.0
    %151 = vmatpush2.msra.mxu0 0.0
    %152 = vmatprep.subr.mxu0 0.0
    %153 = vmatpush2.msra.mxu0 0.0
    %154 = vmatprep.subr.mxu0 0.0
    %155 = vmatpush2.msra.mxu0 0.0
    %156 = vmatprep.subr.mxu0 0.0
    %157 = vmatpush2.msra.mxu0 0.0
    %158 = vmatprep.subr.mxu0 0.0
    %159 = vmatpush2.msra.mxu0 0.0
    %160 = vmatprep.subr.mxu0 0.0
    %161 = vmatpush2.msra.mxu0 0.0
    %162 = vmatprep.subr.mxu0 0.0
    %163 = vmatpush2.msra.mxu0 0.0
    %164 = vmatprep.subr.mxu0 0.0
    %165 = vmatpush2.msra.mxu0 0.0
    %166 = vmatprep.subr.mxu0 0.0
    %167 = vmatpush2.msra.mxu0 0.0
    %168 = vmatprep.subr.mxu0 0.0
    %169 = vmatpush2.msra.mxu0 0.0
    %170 = vmatprep.subr.mxu0 0.0
    %171 = vmatpush2.msra.mxu0 0.0
    %172 = vmatprep.subr.mxu0 0.0
    %173 = vmatpush2.msra.mxu0 0.0
    %174 = vmatprep.mubr.f32.mxu0 0.0
    %175 = vmatmul.mubr.f32.gmra.mxu0 %v62
    %v176 = vpop.f32.mrf.mxu0
    %v177 = vadd.f32 %v108, %v176
    %v178 = vpop.f32.mrf.mxu0
    %179 = vmatprep.mubr.f32.mxu0 0.0
    %180 = vmatmul.mubr.f32.gmra.mxu0 %v63
    %v181 = vpop.f32.mrf.mxu0
    %v182 = vadd.f32 %v108, %v181
    %v183 = vpop.f32.mrf.mxu0
    %184 = vmatprep.mubr.f32.mxu0 0.0
    %185 = vmatmul.mubr.f32.gmra.mxu0 %v64
    %v186 = vpop.f32.mrf.mxu0
    %v187 = vadd.f32 %v108, %v186
    %v188 = vpop.f32.mrf.mxu0
    %189 = vmatprep.mubr.f32.mxu0 0.0
    %190 = vmatmul.mubr.f32.gmra.mxu0 %v65
    %v191 = vpop.f32.mrf.mxu0
    %v192 = vadd.f32 %v108, %v191
    %v193 = vpop.f32.mrf.mxu0
    %194 = vmatprep.mubr.f32.mxu0 0.0
    %195 = vmatmul.mubr.f32.gmra.mxu0 %v66
    %v196 = vpop.f32.mrf.mxu0
    %v197 = vadd.f32 %v108, %v196
    %v198 = vpop.f32.mrf.mxu0
    %199 = vmatprep.mubr.f32.mxu0 0.0
    %200 = vmatmul.mubr.f32.gmra.mxu0 %v67
    %v201 = vpop.f32.mrf.mxu0
    %v202 = vadd.f32 %v108, %v201
    %v203 = vpop.f32.mrf.mxu0
    %204 = vmatprep.mubr.f32.mxu0 0.0
    %205 = vmatmul.mubr.f32.gmra.mxu0 %v68
    %v206 = vpop.f32.mrf.mxu0
    %v207 = vadd.f32 %v108, %v206
    %v208 = vpop.f32.mrf.mxu0
    %209 = vmatprep.mubr.f32.mxu0 0.0
    %210 = vmatmul.mubr.f32.gmra.mxu0 %v69
    %v211 = vpop.f32.mrf.mxu0
    %v212 = vadd.f32 %v108, %v211
    %v213 = vpop.f32.mrf.mxu0
    %214 = vmatprep.mubr.f32.mxu0 0.0
    %215 = vmatmul.mubr.f32.gmra.mxu0 %v70
    %v216 = vpop.f32.mrf.mxu0
    %v217 = vadd.f32 %v108, %v216
    %v218 = vpop.f32.mrf.mxu0
    %219 = vmatprep.mubr.f32.mxu0 0.0
    %220 = vmatmul.mubr.f32.gmra.mxu0 %v71
    %v221 = vpop.f32.mrf.mxu0
    %v222 = vadd.f32 %v108, %v221
    %v223 = vpop.f32.mrf.mxu0
    %224 = vmatprep.mubr.f32.mxu0 0.0
    %225 = vmatmul.mubr.f32.gmra.mxu0 %v72
    %v226 = vpop.f32.mrf.mxu0
    %v227 = vadd.f32 %v108, %v226
    %v228 = vpop.f32.mrf.mxu0
    %229 = vmatprep.mubr.f32.mxu0 0.0
    %230 = vmatmul.mubr.f32.gmra.mxu0 %v73
    %v231 = vpop.f32.mrf.mxu0
    %v232 = vadd.f32 %v108, %v231
    %v233 = vpop.f32.mrf.mxu0
    %234 = vmatprep.mubr.f32.mxu0 0.0
    %235 = vmatmul.mubr.f32.gmra.mxu0 %v74
    %v236 = vpop.f32.mrf.mxu0
    %v237 = vadd.f32 %v108, %v236
    %v238 = vpop.f32.mrf.mxu0
    %239 = vmatprep.mubr.f32.mxu0 0.0
    %240 = vmatmul.mubr.f32.gmra.mxu0 %v75
    %v241 = vpop.f32.mrf.mxu0
    %v242 = vadd.f32 %v108, %v241
    %v243 = vpop.f32.mrf.mxu0
    %244 = vmatprep.mubr.f32.mxu0 0.0
    %245 = vmatmul.mubr.f32.gmra.mxu0 %v76
    %v246 = vpop.f32.mrf.mxu0
    %v247 = vadd.f32 %v108, %v246
    %v248 = vpop.f32.mrf.mxu0
    %249 = vmatprep.mubr.f32.mxu0 0.0
    %250 = vmatmul.mubr.f32.gmra.mxu0 %v77
    %v251 = vpop.f32.mrf.mxu0
    %v252 = vadd.f32 %v108, %v251
    %v253 = vpop.f32.mrf.mxu0
    %254 = vmatprep.mubr.f32.mxu0 0.0
    %255 = vmatmul.mubr.f32.gmra.mxu0 %v78
    %v256 = vpop.f32.mrf.mxu0
    %v257 = vadd.f32 %v108, %v256
    %v258 = vpop.f32.mrf.mxu0
    %259 = vmatprep.mubr.f32.mxu0 0.0
    %260 = vmatmul.mubr.f32.gmra.mxu0 %v79
    %v261 = vpop.f32.mrf.mxu0
    %v262 = vadd.f32 %v108, %v261
    %v263 = vpop.f32.mrf.mxu0
    %264 = vmatprep.mubr.f32.mxu0 0.0
    %265 = vmatmul.mubr.f32.gmra.mxu0 %v80
    %v266 = vpop.f32.mrf.mxu0
    %v267 = vadd.f32 %v108, %v266
    %v268 = vpop.f32.mrf.mxu0
    %269 = vmatprep.mubr.f32.mxu0 0.0
    %270 = vmatmul.mubr.f32.gmra.mxu0 %v81
    %v271 = vpop.f32.mrf.mxu0
    %v272 = vadd.f32 %v108, %v271
    %v273 = vpop.f32.mrf.mxu0
    %274 = vmatprep.mubr.f32.mxu0 0.0
    %275 = vmatmul.mubr.f32.gmra.mxu0 %v82
    %v276 = vpop.f32.mrf.mxu0
    %v277 = vadd.f32 %v108, %v276
    %v278 = vpop.f32.mrf.mxu0
    %279 = vmatprep.mubr.f32.mxu0 0.0
    %280 = vmatmul.mubr.f32.gmra.mxu0 %v83
    %v281 = vpop.f32.mrf.mxu0
    %v282 = vadd.f32 %v108, %v281
    %v283 = vpop.f32.mrf.mxu0
    %284 = vmatprep.mubr.f32.mxu0 0.0
    %285 = vmatmul.mubr.f32.gmra.mxu0 %v84
    %v286 = vpop.f32.mrf.mxu0
    %v287 = vadd.f32 %v108, %v286
    %v288 = vpop.f32.mrf.mxu0
    %289 = vmatprep.mubr.f32.mxu0 0.0
    %290 = vmatmul.mubr.f32.gmra.mxu0 %v85
    %v291 = vpop.f32.mrf.mxu0
    %v292 = vadd.f32 %v108, %v291
    %v293 = vpop.f32.mrf.mxu0
    %294 = vmatprep.mubr.f32.mxu0 0.0
    %295 = vmatmul.mubr.f32.gmra.mxu0 %v86
    %v296 = vpop.f32.mrf.mxu0
    %v297 = vadd.f32 %v108, %v296
    %v298 = vpop.f32.mrf.mxu0
    %299 = vdwg.mxu0
    %v300 = vmax.f32 %v177, 0.0
    %v301 = vmax.f32 %v182, 0.0
    %v302 = vmax.f32 %v187, 0.0
    %v303 = vmax.f32 %v192, 0.0
    %v304 = vmax.f32 %v197, 0.0
    %v305 = vmax.f32 %v202, 0.0
    %v306 = vmax.f32 %v207, 0.0
    %v307 = vmax.f32 %v212, 0.0
    %v308 = vmax.f32 %v217, 0.0
    %v309 = vmax.f32 %v222, 0.0
    %v310 = vmax.f32 %v227, 0.0
    %v311 = vmax.f32 %v232, 0.0
    %v312 = vmax.f32 %v237, 0.0
    %v313 = vmax.f32 %v242, 0.0
    %v314 = vmax.f32 %v247, 0.0
    %v315 = vmax.f32 %v252, 0.0
    %v316 = vmax.f32 %v257, 0.0
    %v317 = vmax.f32 %v262, 0.0
    %v318 = vmax.f32 %v267, 0.0
    %v319 = vmax.f32 %v272, 0.0
    %v320 = vmax.f32 %v277, 0.0
    %v321 = vmax.f32 %v282, 0.0
    %v322 = vmax.f32 %v287, 0.0
    %v323 = vmax.f32 %v292, 0.0
    %v324 = vmax.f32 %v297, 0.0
    %v325 = vld [vmem:[#allocation7] sm:$0xff]
    %v326 = vld [vmem:[#allocation7 + $0x8] sm:$0xff]
    %v327 = vld [vmem:[#allocation7 + $0x10] sm:$0xff]
    %v328 = vld [vmem:[#allocation7 + $0x18] sm:$0xff]
    %v329 = vld [vmem:[#allocation7 + $0x20] sm:$0xff]
    %v330 = vld [vmem:[#allocation7 + $0x28] sm:$0xff]
    %v331 = vld [vmem:[#allocation7 + $0x30] sm:$0xff]
    %v332 = vld [vmem:[#allocation7 + $0x38] sm:$0xff]
    %v333 = vld [vmem:[#allocation7 + $0x40] sm:$0xff]
    %v334 = vld [vmem:[#allocation7 + $0x48] sm:$0xff]
    %v335 = vld [vmem:[#allocation7 + $0x50] sm:$0xff]
    %v336 = vld [vmem:[#allocation7 + $0x58] sm:$0xff]
    %v337 = vld [vmem:[#allocation7 + $0x60] sm:$0xff]
    %v338 = vld [vmem:[#allocation7 + $0x68] sm:$0xff]
    %v339 = vld [vmem:[#allocation7 + $0x70] sm:$0xff]
    %v340 = vld [vmem:[#allocation7 + $0x78] sm:$0xff]
    %v341 = vld [vmem:[%s4] sm:$0x1]
    %v343 = vlaneseq
    %v344 = vshrl.u32 %v343, 7
    %v345 = vsub.s32 0, %v344
    %v346 = vrot.slane %v341, %v345
    %348 = vmatprep.subr.mxu0 0.0
    %349 = vmatpush1.msra.mxu0 %v340
    %350 = vmatprep.subr.mxu0 0.0
    %351 = vmatpush1.msra.mxu0 %v339
    %352 = vmatprep.subr.mxu0 0.0
    %353 = vmatpush1.msra.mxu0 %v338
    %354 = vmatprep.subr.mxu0 0.0
    %355 = vmatpush1.msra.mxu0 %v337
    %356 = vmatprep.subr.mxu0 0.0
    %357 = vmatpush1.msra.mxu0 %v336
    %358 = vmatprep.subr.mxu0 0.0
    %359 = vmatpush1.msra.mxu0 %v335
    %360 = vmatprep.subr.mxu0 0.0
    %361 = vmatpush1.msra.mxu0 %v334
    %362 = vmatprep.subr.mxu0 0.0
    %363 = vmatpush1.msra.mxu0 %v333
    %364 = vmatprep.subr.mxu0 0.0
    %365 = vmatpush1.msra.mxu0 %v332
    %366 = vmatprep.subr.mxu0 0.0
    %367 = vmatpush1.msra.mxu0 %v331
    %368 = vmatprep.subr.mxu0 0.0
    %369 = vmatpush1.msra.mxu0 %v330
    %370 = vmatprep.subr.mxu0 0.0
    %371 = vmatpush1.msra.mxu0 %v329
    %372 = vmatprep.subr.mxu0 0.0
    %373 = vmatpush1.msra.mxu0 %v328
    %374 = vmatprep.subr.mxu0 0.0
    %375 = vmatpush1.msra.mxu0 %v327
    %376 = vmatprep.subr.mxu0 0.0
    %377 = vmatpush1.msra.mxu0 %v326
    %378 = vmatprep.subr.mxu0 0.0
    %379 = vmatpush1.msra.mxu0 %v325
    %380 = vmatprep.subr.mxu0 0.0
    %381 = vmatpush2.msra.mxu0 0.0
    %382 = vmatprep.subr.mxu0 0.0
    %383 = vmatpush2.msra.mxu0 0.0
    %384 = vmatprep.subr.mxu0 0.0
    %385 = vmatpush2.msra.mxu0 0.0
    %386 = vmatprep.subr.mxu0 0.0
    %387 = vmatpush2.msra.mxu0 0.0
    %388 = vmatprep.subr.mxu0 0.0
    %389 = vmatpush2.msra.mxu0 0.0
    %390 = vmatprep.subr.mxu0 0.0
    %391 = vmatpush2.msra.mxu0 0.0
    %392 = vmatprep.subr.mxu0 0.0
    %393 = vmatpush2.msra.mxu0 0.0
    %394 = vmatprep.subr.mxu0 0.0
    %395 = vmatpush2.msra.mxu0 0.0
    %396 = vmatprep.subr.mxu0 0.0
    %397 = vmatpush2.msra.mxu0 0.0
    %398 = vmatprep.subr.mxu0 0.0
    %399 = vmatpush2.msra.mxu0 0.0
    %400 = vmatprep.subr.mxu0 0.0
    %401 = vmatpush2.msra.mxu0 0.0
    %402 = vmatprep.subr.mxu0 0.0
    %403 = vmatpush2.msra.mxu0 0.0
    %404 = vmatprep.subr.mxu0 0.0
    %405 = vmatpush2.msra.mxu0 0.0
    %406 = vmatprep.subr.mxu0 0.0
    %407 = vmatpush2.msra.mxu0 0.0
    %408 = vmatprep.subr.mxu0 0.0
    %409 = vmatpush2.msra.mxu0 0.0
    %410 = vmatprep.subr.mxu0 0.0
    %411 = vmatpush2.msra.mxu0 0.0
    %412 = vmatprep.mubr.f32.mxu0 0.0
    %413 = vmatmul.mubr.f32.gmra.mxu0 %v300
    %v414 = vpop.f32.mrf.mxu0
    %v415 = vadd.f32 %v346, %v414
    %v416 = vpop.f32.mrf.mxu0
    %417 = vmatprep.mubr.f32.mxu0 0.0
    %418 = vmatmul.mubr.f32.gmra.mxu0 %v301
    %v419 = vpop.f32.mrf.mxu0
    %v420 = vadd.f32 %v346, %v419
    %v421 = vpop.f32.mrf.mxu0
    %422 = vmatprep.mubr.f32.mxu0 0.0
    %423 = vmatmul.mubr.f32.gmra.mxu0 %v302
    %v424 = vpop.f32.mrf.mxu0
    %v425 = vadd.f32 %v346, %v424
    %v426 = vpop.f32.mrf.mxu0
    %427 = vmatprep.mubr.f32.mxu0 0.0
    %428 = vmatmul.mubr.f32.gmra.mxu0 %v303
    %v429 = vpop.f32.mrf.mxu0
    %v430 = vadd.f32 %v346, %v429
    %v431 = vpop.f32.mrf.mxu0
    %432 = vmatprep.mubr.f32.mxu0 0.0
    %433 = vmatmul.mubr.f32.gmra.mxu0 %v304
    %v434 = vpop.f32.mrf.mxu0
    %v435 = vadd.f32 %v346, %v434
    %v436 = vpop.f32.mrf.mxu0
    %437 = vmatprep.mubr.f32.mxu0 0.0
    %438 = vmatmul.mubr.f32.gmra.mxu0 %v305
    %v439 = vpop.f32.mrf.mxu0
    %v440 = vadd.f32 %v346, %v439
    %v441 = vpop.f32.mrf.mxu0
    %442 = vmatprep.mubr.f32.mxu0 0.0
    %443 = vmatmul.mubr.f32.gmra.mxu0 %v306
    %v444 = vpop.f32.mrf.mxu0
    %v445 = vadd.f32 %v346, %v444
    %v446 = vpop.f32.mrf.mxu0
    %447 = vmatprep.mubr.f32.mxu0 0.0
    %448 = vmatmul.mubr.f32.gmra.mxu0 %v307
    %v449 = vpop.f32.mrf.mxu0
    %v450 = vadd.f32 %v346, %v449
    %v451 = vpop.f32.mrf.mxu0
    %452 = vmatprep.mubr.f32.mxu0 0.0
    %453 = vmatmul.mubr.f32.gmra.mxu0 %v308
    %v454 = vpop.f32.mrf.mxu0
    %v455 = vadd.f32 %v346, %v454
    %v456 = vpop.f32.mrf.mxu0
    %457 = vmatprep.mubr.f32.mxu0 0.0
    %458 = vmatmul.mubr.f32.gmra.mxu0 %v309
    %v459 = vpop.f32.mrf.mxu0
    %v460 = vadd.f32 %v346, %v459
    %v461 = vpop.f32.mrf.mxu0
    %462 = vmatprep.mubr.f32.mxu0 0.0
    %463 = vmatmul.mubr.f32.gmra.mxu0 %v310
    %v464 = vpop.f32.mrf.mxu0
    %v465 = vadd.f32 %v346, %v464
    %v466 = vpop.f32.mrf.mxu0
    %467 = vmatprep.mubr.f32.mxu0 0.0
    %468 = vmatmul.mubr.f32.gmra.mxu0 %v311
    %v469 = vpop.f32.mrf.mxu0
    %v470 = vadd.f32 %v346, %v469
    %v471 = vpop.f32.mrf.mxu0
    %472 = vmatprep.mubr.f32.mxu0 0.0
    %473 = vmatmul.mubr.f32.gmra.mxu0 %v312
    %v474 = vpop.f32.mrf.mxu0
    %v475 = vadd.f32 %v346, %v474
    %v476 = vpop.f32.mrf.mxu0
    %477 = vmatprep.mubr.f32.mxu0 0.0
    %478 = vmatmul.mubr.f32.gmra.mxu0 %v313
    %v479 = vpop.f32.mrf.mxu0
    %v480 = vadd.f32 %v346, %v479
    %v481 = vpop.f32.mrf.mxu0
    %482 = vmatprep.mubr.f32.mxu0 0.0
    %483 = vmatmul.mubr.f32.gmra.mxu0 %v314
    %v484 = vpop.f32.mrf.mxu0
    %v485 = vadd.f32 %v346, %v484
    %v486 = vpop.f32.mrf.mxu0
    %487 = vmatprep.mubr.f32.mxu0 0.0
    %488 = vmatmul.mubr.f32.gmra.mxu0 %v315
    %v489 = vpop.f32.mrf.mxu0
    %v490 = vadd.f32 %v346, %v489
    %v491 = vpop.f32.mrf.mxu0
    %492 = vmatprep.mubr.f32.mxu0 0.0
    %493 = vmatmul.mubr.f32.gmra.mxu0 %v316
    %v494 = vpop.f32.mrf.mxu0
    %v495 = vadd.f32 %v346, %v494
    %v496 = vpop.f32.mrf.mxu0
    %497 = vmatprep.mubr.f32.mxu0 0.0
    %498 = vmatmul.mubr.f32.gmra.mxu0 %v317
    %v499 = vpop.f32.mrf.mxu0
    %v500 = vadd.f32 %v346, %v499
    %v501 = vpop.f32.mrf.mxu0
    %502 = vmatprep.mubr.f32.mxu0 0.0
    %503 = vmatmul.mubr.f32.gmra.mxu0 %v318
    %v504 = vpop.f32.mrf.mxu0
    %v505 = vadd.f32 %v346, %v504
    %v506 = vpop.f32.mrf.mxu0
    %507 = vmatprep.mubr.f32.mxu0 0.0
    %508 = vmatmul.mubr.f32.gmra.mxu0 %v319
    %v509 = vpop.f32.mrf.mxu0
    %v510 = vadd.f32 %v346, %v509
    %v511 = vpop.f32.mrf.mxu0
    %512 = vmatprep.mubr.f32.mxu0 0.0
    %513 = vmatmul.mubr.f32.gmra.mxu0 %v320
    %v514 = vpop.f32.mrf.mxu0
    %v515 = vadd.f32 %v346, %v514
    %v516 = vpop.f32.mrf.mxu0
    %517 = vmatprep.mubr.f32.mxu0 0.0
    %518 = vmatmul.mubr.f32.gmra.mxu0 %v321
    %v519 = vpop.f32.mrf.mxu0
    %v520 = vadd.f32 %v346, %v519
    %v521 = vpop.f32.mrf.mxu0
    %522 = vmatprep.mubr.f32.mxu0 0.0
    %523 = vmatmul.mubr.f32.gmra.mxu0 %v322
    %v524 = vpop.f32.mrf.mxu0
    %v525 = vadd.f32 %v346, %v524
    %v526 = vpop.f32.mrf.mxu0
    %527 = vmatprep.mubr.f32.mxu0 0.0
    %528 = vmatmul.mubr.f32.gmra.mxu0 %v323
    %v529 = vpop.f32.mrf.mxu0
    %v530 = vadd.f32 %v346, %v529
    %v531 = vpop.f32.mrf.mxu0
    %532 = vmatprep.mubr.f32.mxu0 0.0
    %533 = vmatmul.mubr.f32.gmra.mxu0 %v324
    %v534 = vpop.f32.mrf.mxu0
    %v535 = vadd.f32 %v346, %v534
    %v536 = vpop.f32.mrf.mxu0
    %537 = vdwg.mxu0
    %538 = vmax.xlane.f32.xlu0 %v415
    %v539 = vpop.xlane.xlu0 %538
    %540 = vmax.xlane.f32.xlu0 %v420
    %v541 = vpop.xlane.xlu0 %540
    %542 = vmax.xlane.f32.xlu0 %v425
    %v543 = vpop.xlane.xlu0 %542
    %544 = vmax.xlane.f32.xlu0 %v430
    %v545 = vpop.xlane.xlu0 %544
    %546 = vmax.xlane.f32.xlu0 %v435
    %v547 = vpop.xlane.xlu0 %546
    %548 = vmax.xlane.f32.xlu0 %v440
    %v549 = vpop.xlane.xlu0 %548
    %550 = vmax.xlane.f32.xlu0 %v445
    %v551 = vpop.xlane.xlu0 %550
    %552 = vmax.xlane.f32.xlu0 %v450
    %v553 = vpop.xlane.xlu0 %552
    %554 = vmax.xlane.f32.xlu0 %v455
    %v555 = vpop.xlane.xlu0 %554
    %556 = vmax.xlane.f32.xlu0 %v460
    %v557 = vpop.xlane.xlu0 %556
    %558 = vmax.xlane.f32.xlu0 %v465
    %v559 = vpop.xlane.xlu0 %558
    %560 = vmax.xlane.f32.xlu0 %v470
    %v561 = vpop.xlane.xlu0 %560
    %562 = vmax.xlane.f32.xlu0 %v475
    %v563 = vpop.xlane.xlu0 %562
    %564 = vmax.xlane.f32.xlu0 %v480
    %v565 = vpop.xlane.xlu0 %564
    %566 = vmax.xlane.f32.xlu0 %v485
    %v567 = vpop.xlane.xlu0 %566
    %568 = vmax.xlane.f32.xlu0 %v490
    %v569 = vpop.xlane.xlu0 %568
    %570 = vmax.xlane.f32.xlu0 %v495
    %v571 = vpop.xlane.xlu0 %570
    %572 = vmax.xlane.f32.xlu0 %v500
    %v573 = vpop.xlane.xlu0 %572
    %574 = vmax.xlane.f32.xlu0 %v505
    %v575 = vpop.xlane.xlu0 %574
    %576 = vmax.xlane.f32.xlu0 %v510
    %v577 = vpop.xlane.xlu0 %576
    %578 = vmax.xlane.f32.xlu0 %v515
    %v579 = vpop.xlane.xlu0 %578
    %580 = vmax.xlane.f32.xlu0 %v520
    %v581 = vpop.xlane.xlu0 %580
    %582 = vmax.xlane.f32.xlu0 %v525
    %v583 = vpop.xlane.xlu0 %582
    %584 = vmax.xlane.f32.xlu0 %v530
    %v585 = vpop.xlane.xlu0 %584
    %586 = vmax.xlane.f32.xlu0 %v535
    %v587 = vpop.xlane.xlu0 %586
    %v588 = vsub.f32 %v415, %v539
    %v589 = vsub.f32 %v420, %v541
    %v590 = vsub.f32 %v425, %v543
    %v591 = vsub.f32 %v430, %v545
    %v592 = vsub.f32 %v435, %v547
    %v593 = vsub.f32 %v440, %v549
    %v594 = vsub.f32 %v445, %v551
    %v595 = vsub.f32 %v450, %v553
    %v596 = vsub.f32 %v455, %v555
    %v597 = vsub.f32 %v460, %v557
    %v598 = vsub.f32 %v465, %v559
    %v599 = vsub.f32 %v470, %v561
    %v600 = vsub.f32 %v475, %v563
    %v601 = vsub.f32 %v480, %v565
    %v602 = vsub.f32 %v485, %v567
    %v603 = vsub.f32 %v490, %v569
    %v604 = vsub.f32 %v495, %v571
    %v605 = vsub.f32 %v500, %v573
    %v606 = vsub.f32 %v505, %v575
    %v607 = vsub.f32 %v510, %v577
    %v608 = vsub.f32 %v515, %v579
    %v609 = vsub.f32 %v520, %v581
    %v610 = vsub.f32 %v525, %v583
    %v611 = vsub.f32 %v530, %v585
    %v612 = vsub.f32 %v535, %v587
    %v613 = vmul.f32 %v588, 1.442695
    %v614 = vpow.pop %v613
    %v615 = vmul.f32 %v589, 1.442695
    %v616 = vpow.pop %v615
    %v617 = vmul.f32 %v590, 1.442695
    %v618 = vpow.pop %v617
    %v619 = vmul.f32 %v591, 1.442695
    %v620 = vpow.pop %v619
    %v621 = vmul.f32 %v592, 1.442695
    %v622 = vpow.pop %v621
    %v623 = vmul.f32 %v593, 1.442695
    %v624 = vpow.pop %v623
    %v625 = vmul.f32 %v594, 1.442695
    %v626 = vpow.pop %v625
    %v627 = vmul.f32 %v595, 1.442695
    %v628 = vpow.pop %v627
    %v629 = vmul.f32 %v596, 1.442695
    %v630 = vpow.pop %v629
    %v631 = vmul.f32 %v597, 1.442695
    %v632 = vpow.pop %v631
    %v633 = vmul.f32 %v598, 1.442695
    %v634 = vpow.pop %v633
    %v635 = vmul.f32 %v599, 1.442695
    %v636 = vpow.pop %v635
    %v637 = vmul.f32 %v600, 1.442695
    %v638 = vpow.pop %v637
    %v639 = vmul.f32 %v601, 1.442695
    %v640 = vpow.pop %v639
    %v641 = vmul.f32 %v602, 1.442695
    %v642 = vpow.pop %v641
    %v643 = vmul.f32 %v603, 1.442695
    %v644 = vpow.pop %v643
    %v645 = vmul.f32 %v604, 1.442695
    %v646 = vpow.pop %v645
    %v647 = vmul.f32 %v605, 1.442695
    %v648 = vpow.pop %v647
    %v649 = vmul.f32 %v606, 1.442695
    %v650 = vpow.pop %v649
    %v651 = vmul.f32 %v607, 1.442695
    %v652 = vpow.pop %v651
    %v653 = vmul.f32 %v608, 1.442695
    %v654 = vpow.pop %v653
    %v655 = vmul.f32 %v609, 1.442695
    %v656 = vpow.pop %v655
    %v657 = vmul.f32 %v610, 1.442695
    %v658 = vpow.pop %v657
    %v659 = vmul.f32 %v611, 1.442695
    %v660 = vpow.pop %v659
    %v661 = vmul.f32 %v612, 1.442695
    %v662 = vpow.pop %v661
    %663 = vadd.xlane.f32.xlu0 %v614
    %v664 = vpop.xlane.xlu0 %663
    %665 = vadd.xlane.f32.xlu0 %v616
    %v666 = vpop.xlane.xlu0 %665
    %667 = vadd.xlane.f32.xlu0 %v618
    %v668 = vpop.xlane.xlu0 %667
    %669 = vadd.xlane.f32.xlu0 %v620
    %v670 = vpop.xlane.xlu0 %669
    %671 = vadd.xlane.f32.xlu0 %v622
    %v672 = vpop.xlane.xlu0 %671
    %673 = vadd.xlane.f32.xlu0 %v624
    %v674 = vpop.xlane.xlu0 %673
    %675 = vadd.xlane.f32.xlu0 %v626
    %v676 = vpop.xlane.xlu0 %675
    %677 = vadd.xlane.f32.xlu0 %v628
    %v678 = vpop.xlane.xlu0 %677
    %679 = vadd.xlane.f32.xlu0 %v630
    %v680 = vpop.xlane.xlu0 %679
    %681 = vadd.xlane.f32.xlu0 %v632
    %v682 = vpop.xlane.xlu0 %681
    %683 = vadd.xlane.f32.xlu0 %v634
    %v684 = vpop.xlane.xlu0 %683
    %685 = vadd.xlane.f32.xlu0 %v636
    %v686 = vpop.xlane.xlu0 %685
    %687 = vadd.xlane.f32.xlu0 %v638
    %v688 = vpop.xlane.xlu0 %687
    %689 = vadd.xlane.f32.xlu0 %v640
    %v690 = vpop.xlane.xlu0 %689
    %691 = vadd.xlane.f32.xlu0 %v642
    %v692 = vpop.xlane.xlu0 %691
    %693 = vadd.xlane.f32.xlu0 %v644
    %v694 = vpop.xlane.xlu0 %693
    %695 = vadd.xlane.f32.xlu0 %v646
    %v696 = vpop.xlane.xlu0 %695
    %697 = vadd.xlane.f32.xlu0 %v648
    %v698 = vpop.xlane.xlu0 %697
    %699 = vadd.xlane.f32.xlu0 %v650
    %v700 = vpop.xlane.xlu0 %699
    %701 = vadd.xlane.f32.xlu0 %v652
    %v702 = vpop.xlane.xlu0 %701
    %703 = vadd.xlane.f32.xlu0 %v654
    %v704 = vpop.xlane.xlu0 %703
    %705 = vadd.xlane.f32.xlu0 %v656
    %v706 = vpop.xlane.xlu0 %705
    %707 = vadd.xlane.f32.xlu0 %v658
    %v708 = vpop.xlane.xlu0 %707
    %709 = vadd.xlane.f32.xlu0 %v660
    %v710 = vpop.xlane.xlu0 %709
    %711 = vadd.xlane.f32.xlu0 %v662
    %v712 = vpop.xlane.xlu0 %711
    %v713 = vrcp.pop %v664
    %v714 = vmul.f32 %v614, %v713
    %v715 = vrcp.pop %v666
    %v716 = vmul.f32 %v616, %v715
    %v717 = vrcp.pop %v668
    %v718 = vmul.f32 %v618, %v717
    %v719 = vrcp.pop %v670
    %v720 = vmul.f32 %v620, %v719
    %v721 = vrcp.pop %v672
    %v722 = vmul.f32 %v622, %v721
    %v723 = vrcp.pop %v674
    %v724 = vmul.f32 %v624, %v723
    %v725 = vrcp.pop %v676
    %v726 = vmul.f32 %v626, %v725
    %v727 = vrcp.pop %v678
    %v728 = vmul.f32 %v628, %v727
    %v729 = vrcp.pop %v680
    %v730 = vmul.f32 %v630, %v729
    %v731 = vrcp.pop %v682
    %v732 = vmul.f32 %v632, %v731
    %v733 = vrcp.pop %v684
    %v734 = vmul.f32 %v634, %v733
    %v735 = vrcp.pop %v686
    %v736 = vmul.f32 %v636, %v735
    %v737 = vrcp.pop %v688
    %v738 = vmul.f32 %v638, %v737
    %v739 = vrcp.pop %v690
    %v740 = vmul.f32 %v640, %v739
    %v741 = vrcp.pop %v692
    %v742 = vmul.f32 %v642, %v741
    %v743 = vrcp.pop %v694
    %v744 = vmul.f32 %v644, %v743
    %v745 = vrcp.pop %v696
    %v746 = vmul.f32 %v646, %v745
    %v747 = vrcp.pop %v698
    %v748 = vmul.f32 %v648, %v747
    %v749 = vrcp.pop %v700
    %v750 = vmul.f32 %v650, %v749
    %v751 = vrcp.pop %v702
    %v752 = vmul.f32 %v652, %v751
    %v753 = vrcp.pop %v704
    %v754 = vmul.f32 %v654, %v753
    %v755 = vrcp.pop %v706
    %v756 = vmul.f32 %v656, %v755
    %v757 = vrcp.pop %v708
    %v758 = vmul.f32 %v658, %v757
    %v759 = vrcp.pop %v710
    %v760 = vmul.f32 %v660, %v759
    %v761 = vrcp.pop %v712
    %v762 = vmul.f32 %v662, %v761
    %763 = vst [vmem:[#allocation8] sm:$0xff] %v714
    %764 = vst [vmem:[#allocation8 + $0x8] sm:$0xff] %v716
    %765 = vst [vmem:[#allocation8 + $0x10] sm:$0xff] %v718
    %766 = vst [vmem:[#allocation8 + $0x18] sm:$0xff] %v720
    %767 = vst [vmem:[#allocation8 + $0x20] sm:$0xff] %v722
    %768 = vst [vmem:[#allocation8 + $0x28] sm:$0xff] %v724
    %769 = vst [vmem:[#allocation8 + $0x30] sm:$0xff] %v726
    %770 = vst [vmem:[#allocation8 + $0x38] sm:$0xff] %v728
    %771 = vst [vmem:[#allocation8 + $0x40] sm:$0xff] %v730
    %772 = vst [vmem:[#allocation8 + $0x48] sm:$0xff] %v732
    %773 = vst [vmem:[#allocation8 + $0x50] sm:$0xff] %v734
    %774 = vst [vmem:[#allocation8 + $0x58] sm:$0xff] %v736
    %775 = vst [vmem:[#allocation8 + $0x60] sm:$0xff] %v738
    %776 = vst [vmem:[#allocation8 + $0x68] sm:$0xff] %v740
    %777 = vst [vmem:[#allocation8 + $0x70] sm:$0xff] %v742
    %778 = vst [vmem:[#allocation8 + $0x78] sm:$0xff] %v744
    %779 = vst [vmem:[#allocation8 + $0x80] sm:$0xff] %v746
    %780 = vst [vmem:[#allocation8 + $0x88] sm:$0xff] %v748
    %781 = vst [vmem:[#allocation8 + $0x90] sm:$0xff] %v750
    %782 = vst [vmem:[#allocation8 + $0x98] sm:$0xff] %v752
    %783 = vst [vmem:[#allocation8 + $0xa0] sm:$0xff] %v754
    %784 = vst [vmem:[#allocation8 + $0xa8] sm:$0xff] %v756
    %785 = vst [vmem:[#allocation8 + $0xb0] sm:$0xff] %v758
    %786 = vst [vmem:[#allocation8 + $0xb8] sm:$0xff] %v760
    %787 = vst [vmem:[#allocation8 + $0xc0] sm:$0xff] %v762
    // Predicated region
    $region34: #{tpu_custom_call.1} parent=1 // pred_check
      _
    $region35: #{tpu_custom_call.1} parent=1 // pred_check_branch
      %789 = sbr.rel (0) target = $region37
    $region36: #{tpu_custom_call.1} parent=1 // pred_region
      %s791 = ssub.s32 3200, 3200
      %792 = vsyncadd [#allocation4], %s791
      %s793 = sshll.u32 [#allocation8], 4
      %s794 = int_to_ptr.vmem [resolvable:$true] %s793
      %799 = dma.vmem_to_hbm [thread:$0]  %s794, 3200, %s5, [#allocation4], 128, 128, 8
    $region37: #{tpu_custom_call.1} parent=1 // pred_fallthru
      _
    // Predicated region
    $region38: #{tpu_custom_call.1} parent=1 // pred_check
      _
    $region39: #{tpu_custom_call.1} parent=1 // pred_check_branch
      %801 = sbr.rel (0) target = $region41
    $region40: #{tpu_custom_call.1} parent=1 // pred_region
      %802 = dma.done [#allocation4], 3200
    $region41: #{tpu_custom_call.1} parent=1 // pred_fallthru
      _
    %803 = vsyncpa [#allocation3], 1
    %804 = vsyncpa [#allocation6], 1
    %805 = vsyncpa [#allocation4], 1

</llo_original>
